<compile_context>
chip_gen: v6e
topology: v6e:2x2x1
jax: 0.10.0
libtpu: 0.0.40
codegen_flags: <defaults>
</compile_context>

<pallas_src>
import functools

import jax
import jax.numpy as jnp
from jax.experimental import pallas as pl
from jax.experimental.pallas import tpu as pltpu


def _embeddings_kernel(tok_ref, w_ref, const_ref, out_ref, *, bt, n_patches):
    # tok_ref:   (1, bt*N, Kp)  bf16 patch rows for this batch tile
    # w_ref:     (Kp, ht)       bf16 flattened conv-weight tile
    # const_ref: (T, ht)        f32 folded constants: row 0 = cls+pos[0], rows 1.. = conv_b+pos[i]
    # out_ref:   (bt, T, ht)
    proj = jnp.dot(tok_ref[0], w_ref[...],
                   preferred_element_type=jnp.float32)          # (bt*N, ht) f32 acc on MXU
    row0 = const_ref[0:1, :].astype(out_ref.dtype)               # cls row, no matmul needed
    rows = const_ref[1:, :]                                      # (N, ht) f32
    for b in range(bt):  # bt <= 8: fully unrolled, cheap VPU adds + stores
        out_ref[b, 0:1, :] = row0
        out_ref[b, 1:, :] = (proj[b * n_patches:(b + 1) * n_patches, :]
                             + rows).astype(out_ref.dtype)


def _vmem_capacity_bytes():
    """Trace-time VMEM capacity query with a conservative (v7x-sized) fallback."""
    try:
        info = pltpu.get_tpu_info()
        for attr in ("vmem_capacity_bytes", "vmem_bytes", "vmem_size_bytes"):
            v = getattr(info, attr, None)
            if v:
                return int(v)
    except Exception:
        pass
    return 64 * 1024 * 1024


def _pick_tiles(B, N, T, Kp, hidden, out_dtype, max_batch_tile):
    """Pick (bt, ht, vmem_limit_bytes) so double-buffered blocks fit the VMEM budget."""
    cap = _vmem_capacity_bytes()
    budget = int(cap * 0.75)          # ~48 MiB on v7x (64 MiB/TC), ~96 MiB on v5e/v6e
    out_isz = jnp.dtype(out_dtype).itemsize

    # Keep nbt >= 2 when B >= 2 so the megacore (v7x dual-TC) split lands on the batch
    # axis: disjoint token blocks per TC, no duplicated DMA of the largest operand.
    bt_cap = min(max_batch_tile, max(1, B // 2)) if B >= 2 else max_batch_tile
    bt_cands = [d for d in range(max(bt_cap, 1), 0, -1) if B % d == 0]

    # ht must be the full hidden dim or a 128-aligned divisor of it.
    ht_cands = [hidden] + [d for d in range(hidden - 128, 127, -128) if hidden % d == 0]

    def _bytes(bt, ht):
        tok = bt * N * Kp * 2                 # bf16 tokens
        w = Kp * ht * 2                       # bf16 weight tile
        cst = T * ht * 4                      # f32 folded constants (not bt-tiled)
        out = bt * T * ht * out_isz
        return 2 * (tok + w + cst + out)      # default 2-deep pipelining

    def _limit(need):
        return min(int(cap * 0.9), max(32 * 1024 * 1024, int(need * 1.3)))

    for bt in bt_cands:
        for ht in ht_cands:
            need = _bytes(bt, ht)
            if need <= budget:
                return bt, ht, _limit(need)
    bt, ht = bt_cands[-1], ht_cands[-1]
    return bt, ht, _limit(_bytes(bt, ht))


def vit_embeddings(x_nchw, conv_w, conv_b, cls_token, pos_emb, patch_size,
                   *, compute_dtype=jnp.bfloat16, out_dtype=None, max_batch_tile=8):
    """x_nchw: (B, C, H, W). conv_w: (hidden, C, P, P) PyTorch layout. conv_b: (hidden,).
    cls_token: (1, 1, hidden). pos_emb: (1, N+1, hidden). Returns (B, N+1, hidden).

    Precision: patches/weights stream in `compute_dtype` (bf16) with f32 MXU accumulation;
    pass compute_dtype=jnp.float32 for exact f32-conv parity. `out_dtype` defaults to the
    input dtype; set jnp.bfloat16 for bf16 models to halve the output writeback stream."""
    B, C, H, W = x_nchw.shape
    P = patch_size
    hidden = conv_w.shape[0]
    nh, nw = H // P, W // P
    N = nh * nw
    T = N + 1
    K = C * P * P
    out_dtype = x_nchw.dtype if out_dtype is None else out_dtype

    # Zero-pad ragged K (e.g. patch-14 models) to a 128 multiple when overhead is modest.
    pad_k = (-K) % 128
    if pad_k and pad_k > K // 4:
        pad_k = 0
    Kp = K + pad_k

    # --- glue: extract non-overlapping patches (bf16), flatten to (B, N, Kp) ---
    # K-axis ordering is (c, ph, pw), matching conv_w.reshape(hidden, C*P*P).
    # No cls pad here: cls rows are emitted in-kernel from the folded constants.
    # TODO(synk): patch extraction could be fused into the kernel via a channel/K
    # grid axis + K-reduction accumulator to remove this remaining HBM round trip.
    xc = x_nchw.astype(compute_dtype)
    patches = xc.reshape(B, C, nh, P, nw, P).transpose(0, 2, 4, 1, 3, 5).reshape(B, N, K)
    if pad_k:
        patches = jnp.pad(patches, ((0, 0), (0, 0), (0, pad_k)))

    w_flat = conv_w.reshape(hidden, K).T.astype(compute_dtype)          # (K, hidden)
    if pad_k:
        w_flat = jnp.pad(w_flat, ((0, pad_k), (0, 0)))                  # (Kp, hidden)

    # Fold conv bias and cls token into the position embedding once (f32 constants),
    # as a single (T, hidden) stream — not tiled by the batch tile.
    pos = pos_emb.reshape(T, hidden).astype(jnp.float32)
    row0 = cls_token.reshape(1, hidden).astype(jnp.float32) + pos[0:1]
    rows = conv_b.reshape(1, hidden).astype(jnp.float32) + pos[1:]
    const = jnp.concatenate([row0, rows], axis=0)                        # (T, hidden)

    bt, ht, vmem_limit = _pick_tiles(B, N, T, Kp, hidden, out_dtype, max_batch_tile)
    nbt, nht = B // bt, hidden // ht

    tokens = patches.reshape(nbt, bt * N, Kp)    # contiguous regroup (no copy)

    grid_spec = pltpu.PrefetchScalarGridSpec(
        num_scalar_prefetch=0,
        grid=(nbt, nht),
        in_specs=[
            pl.BlockSpec((1, bt * N, Kp), lambda i, j: (i, 0, 0)),   # batch-tiled tokens
            pl.BlockSpec((Kp, ht), lambda i, j: (0, j)),             # weight tile
            pl.BlockSpec((T, ht), lambda i, j: (0, j)),              # folded constants
        ],
        out_specs=pl.BlockSpec((bt, T, ht), lambda i, j: (i, 0, j)),
    )

    out = pl.pallas_call(
        functools.partial(_embeddings_kernel, bt=bt, n_patches=N),
        out_shape=jax.ShapeDtypeStruct((B, T, hidden), out_dtype),
        grid_spec=grid_spec,
        compiler_params=pltpu.CompilerParams(
            dimension_semantics=("parallel", "parallel"),
            vmem_limit_bytes=vmem_limit),
    )(tokens, w_flat, const)

    return out


def _reference_f32(x_nchw, conv_w, conv_b, cls_token, pos_emb, patch_size):
    """Plain-JAX f32 reference reproducing the PyTorch forward exactly."""
    B, C, H, W = x_nchw.shape
    P = patch_size
    hidden = conv_w.shape[0]
    nh, nw = H // P, W // P
    N = nh * nw
    patches = x_nchw.reshape(B, C, nh, P, nw, P).transpose(0, 2, 4, 1, 3, 5).reshape(B, N, C * P * P)
    proj = patches @ conv_w.reshape(hidden, -1).T + conv_b[None, None, :]
    cls = jnp.broadcast_to(cls_token, (B, 1, hidden))
    return jnp.concatenate([cls, proj], axis=1) + pos_emb


def _reference_bf16(x_nchw, conv_w, conv_b, cls_token, pos_emb, patch_size,
                    compute_dtype=jnp.bfloat16, out_dtype=None):
    """Reference mirroring the kernel's bf16-input / f32-accumulate matmul."""
    B, C, H, W = x_nchw.shape
    P = patch_size
    hidden = conv_w.shape[0]
    nh, nw = H // P, W // P
    N = nh * nw
    out_dtype = x_nchw.dtype if out_dtype is None else out_dtype
    patches = x_nchw.astype(compute_dtype).reshape(B, C, nh, P, nw, P) \
                    .transpose(0, 2, 4, 1, 3, 5).reshape(B, N, C * P * P)
    w = conv_w.reshape(hidden, -1).T.astype(compute_dtype)
    proj = jnp.einsum("bnk,kh->bnh", patches, w, preferred_element_type=jnp.float32)
    proj = proj + conv_b[None, None, :].astype(jnp.float32)
    cls = jnp.broadcast_to(cls_token, (B, 1, hidden)).astype(jnp.float32)
    return (jnp.concatenate([cls, proj], axis=1) + pos_emb.astype(jnp.float32)).astype(out_dtype)


if __name__ == "__main__":
    # config: image 16x16, 4 channels, patch 4 -> 16 patches, hidden 32
    B, C, IMG, P, HID = 2, 4, 16, 4, 32
    N = (IMG // P) * (IMG // P)

    key = jax.random.PRNGKey(0)
    kx, kw, kb, kc, kp = jax.random.split(key, 5)
    x = jax.random.normal(kx, (B, C, IMG, IMG), dtype=jnp.float32)
    conv_w = jax.random.normal(kw, (HID, C, P, P), dtype=jnp.float32) * 0.02
    conv_b = jax.random.normal(kb, (HID,), dtype=jnp.float32) * 0.02
    cls_token = jax.random.normal(kc, (1, 1, HID), dtype=jnp.float32)
    pos_emb = jax.random.normal(kp, (1, N + 1, HID), dtype=jnp.float32)

    out = vit_embeddings(x, conv_w, conv_b, cls_token, pos_emb, P)
    out = jax.block_until_ready(out)
    assert out.shape == (B, N + 1, HID), out.shape
    assert out.dtype == x.dtype

    # Tight check against a reference that uses the same bf16-input / f32-accumulate math.
    ref_bf16 = _reference_bf16(x, conv_w, conv_b, cls_token, pos_emb, P)
    err = float(jnp.max(jnp.abs(out - ref_bf16)))
    assert jnp.allclose(out, ref_bf16, atol=1e-4, rtol=1e-4), err

    # Loose sanity check against the exact f32 PyTorch-equivalent forward.
    ref_f32 = _reference_f32(x, conv_w, conv_b, cls_token, pos_emb, P)
    err32 = float(jnp.max(jnp.abs(out - ref_f32)))
    assert jnp.allclose(out, ref_f32, atol=5e-2, rtol=5e-2), err32

    # Exercise the reduced-writeback bf16 output path as well.
    out_bf16 = jax.block_until_ready(
        vit_embeddings(x, conv_w, conv_b, cls_token, pos_emb, P, out_dtype=jnp.bfloat16))
    assert out_bf16.dtype == jnp.bfloat16 and out_bf16.shape == (B, N + 1, HID)
    errb = float(jnp.max(jnp.abs(out_bf16.astype(jnp.float32) - ref_f32)))
    assert jnp.allclose(out_bf16.astype(jnp.float32), ref_f32, atol=1e-1, rtol=1e-1), errb

    print("KERNEL_OK")
</pallas_src>

<mosaic_0001>
module attributes {stable_mosaic.version = 11 : i64} {
  func.func @_embeddings_kernel(%arg0: i32, %arg1: i32, %arg2: memref<1x16x64xbf16, #tpu.memory_space<vmem>>, %arg3: memref<64x32xbf16, #tpu.memory_space<vmem>>, %arg4: memref<17x32xf32, #tpu.memory_space<vmem>>, %arg5: memref<1x17x32xf32, #tpu.memory_space<vmem>>) attributes {dimension_semantics = [#tpu.dimension_semantics<parallel>, #tpu.dimension_semantics<parallel>], iteration_bounds = array<i64: 2, 1>, scalar_prefetch = 0 : i64, scratch_operands = 0 : i64, tpu.core_type = #tpu.core_type<tc>, window_params = [{transform_indices = @transform_0, window_bounds = array<i64: 1, 16, 64>}, {transform_indices = @transform_1, window_bounds = array<i64: 64, 32>}, {transform_indices = @transform_2, window_bounds = array<i64: 17, 32>}, {transform_indices = @transform_3, window_bounds = array<i64: 1, 17, 32>}]} {
    %c0 = arith.constant 0 : index
    %c0_0 = arith.constant 0 : index
    %c0_1 = arith.constant 0 : index
    %0 = vector.load %arg2[%c0, %c0_0, %c0_1] : memref<1x16x64xbf16, #tpu.memory_space<vmem>>, vector<1x16x64xbf16>
    %1 = vector.shape_cast %0 : vector<1x16x64xbf16> to vector<16x64xbf16>
    %c0_2 = arith.constant 0 : index
    %c0_3 = arith.constant 0 : index
    %2 = vector.load %arg3[%c0_2, %c0_3] : memref<64x32xbf16, #tpu.memory_space<vmem>>, vector<64x32xbf16>
    %cst = arith.constant dense<0.000000e+00> : vector<16x32xf32>
    %3 = tpu.matmul %1, %2, %cst {dimension_numbers = #tpu.dot_dimension_numbers<[1], [0], [0], [1], [0, 0, 1, 1], [], []>} : vector<16x64xbf16>, vector<64x32xbf16>, vector<16x32xf32> -> vector<16x32xf32>
    %c0_4 = arith.constant 0 : index
    %c0_5 = arith.constant 0 : index
    %4 = vector.load %arg4[%c0_4, %c0_5] : memref<17x32xf32, #tpu.memory_space<vmem>>, vector<1x32xf32>
    %c1 = arith.constant 1 : index
    %c0_6 = arith.constant 0 : index
    %5 = vector.load %arg4[%c1, %c0_6] : memref<17x32xf32, #tpu.memory_space<vmem>>, vector<16x32xf32>
    %c0_7 = arith.constant 0 : index
    %c0_8 = arith.constant 0 : index
    %c0_9 = arith.constant 0 : index
    %6 = vector.load %arg5[%c0_7, %c0_8, %c0_9] : memref<1x17x32xf32, #tpu.memory_space<vmem>>, vector<1x1x32xf32>
    %7 = vector.shape_cast %6 : vector<1x1x32xf32> to vector<1x32xf32>
    %8 = vector.shape_cast %4 : vector<1x32xf32> to vector<1x1x32xf32>
    tpu.vector_store %arg5[%c0_7, %c0_8, %c0_9], %8 {strides = array<i32>} : memref<1x17x32xf32, #tpu.memory_space<vmem>>, vector<1x1x32xf32>,
    %9 = arith.addf %3, %5 : vector<16x32xf32>
    %c0_10 = arith.constant 0 : index
    %c1_11 = arith.constant 1 : index
    %c0_12 = arith.constant 0 : index
    %10 = vector.load %arg5[%c0_10, %c1_11, %c0_12] : memref<1x17x32xf32, #tpu.memory_space<vmem>>, vector<1x16x32xf32>
    %11 = vector.shape_cast %10 : vector<1x16x32xf32> to vector<16x32xf32>
    %12 = vector.shape_cast %9 : vector<16x32xf32> to vector<1x16x32xf32>
    tpu.vector_store %arg5[%c0_10, %c1_11, %c0_12], %12 {strides = array<i32>} : memref<1x17x32xf32, #tpu.memory_space<vmem>>, vector<1x16x32xf32>,
    return
  }
  func.func @transform_0(%arg0: i32, %arg1: i32) -> (i32, i32, i32) {
    %c0_i32 = arith.constant 0 : i32
    %c0_i32_0 = arith.constant 0 : i32
    %c0_i32_1 = arith.constant 0 : i32
    return %arg0, %c0_i32, %c0_i32_0 : i32, i32, i32
  }
  func.func @transform_1(%arg0: i32, %arg1: i32) -> (i32, i32) {
    %c0_i32 = arith.constant 0 : i32
    %c0_i32_0 = arith.constant 0 : i32
    return %c0_i32, %arg1 : i32, i32
  }
  func.func @transform_2(%arg0: i32, %arg1: i32) -> (i32, i32) {
    %c0_i32 = arith.constant 0 : i32
    %c0_i32_0 = arith.constant 0 : i32
    return %c0_i32, %arg1 : i32, i32
  }
  func.func @transform_3(%arg0: i32, %arg1: i32) -> (i32, i32, i32) {
    %c0_i32 = arith.constant 0 : i32
    %c0_i32_0 = arith.constant 0 : i32
    return %arg0, %c0_i32, %arg1 : i32, i32, i32
  }
}

</mosaic_0001>

<llo_original>
// kernel: tpu_custom_call.1
$region0: #{tpu_custom_call.1}
  #allocation0 [shape = 'u32[]', space=smem, size = 0x4, offset = 0x4, fixed_abs, tag = 'smem constant byte address 0x4 - core index']
  #allocation1 [shape = 'u32[144,128]{1,0:T(1,128)}', space=vmem, size = 0x12000, scoped, tag = 'internal scratch']
  %s0 = inlined_call_operand.vmem [shape: bf16[2,16,64], index: 0, kind: input, shape index: {}]
  %s1 = inlined_call_operand.vmem [shape: bf16[64,32], index: 1, kind: input, shape index: {}]
  %s2 = inlined_call_operand.vmem [shape: f32[17,32], index: 2, kind: input, shape index: {}]
  %s3 = inlined_call_operand.vmem [shape: f32[2,17,32], index: 3, kind: output, shape index: {}]
  %s4 = sld [smem:[#allocation0]]
  $region45: #{tpu_custom_call.1} parent=0
    _
  %s6 = ssub.s32 1, %s4
  %s7 = scalar_select 0, %s6, %s4
  loop: start=0, step=1, limit=4
  $region2: #{tpu_custom_call.1} parent=0 // loop_pre_header
    _
  $region3: #{tpu_custom_call.1} parent=0 // loop_header
    %s9 = sphi 0, %s13
    %p10 = scmp.ge.s32.totalorder %s9, 4
    %s16 = sphi 0, %s28
    %s17 = sphi 0, %s24
    %s18 = sphi 0, %s16
    %s19 = sphi 0, %s17
    %s20 = sphi 0, %s18
    %s21 = sphi 0, %s19
    %s31 = sphi 0, %s33
    %s34 = sphi 0, %s31
    %s35 = sphi 0, %s34
    %s51 = sphi 0, %s35
    %s57 = sphi 0, %s59
    %s60 = sphi 0, %s57
    %s61 = sphi 0, %s60
    %s77 = sphi 0, %s61
    %s83 = sphi 0, %s85
    %s86 = sphi 0, %s83
    %s87 = sphi 0, %s86
    %s103 = sphi 0, %s87
    %s111 = sphi 0, %s113
    %s114 = sphi 0, %s111
    %s115 = sphi 0, %s114
    %s131 = sphi 0, %s115
  $region4: #{tpu_custom_call.1} parent=0 // loop_header_branch
    %12 = sbr.rel (%p10) target = $region8
  $region5: #{tpu_custom_call.1} parent=0 // loop_body
    %s14 = ssub.s32 %s9, 1
    %s15 = ssub.s32 %s9, 2
    %s22 = sadd.s32 1, %s17
    %p23 = scmp.ge.s32.totalorder %s22, 1
    %s24 = scalar_select %p23, 0, %s22
    %s25 = sadd.s32 1, %s16
    %s26 = scalar_select %p23, %s25, %s16
    %p27 = scmp.ge.s32.totalorder %s26, 2
    %s28 = scalar_select %p27, 0, %s26
    %s29 = ssub.s32 %s16, %s28
    %p30 = scmp.eq.s32.totalorder %s29, 0
    %s32 = sadd.s32 %s31, 1
    %s33 = scalar_select %p30, %s31, %s32
    %p36 = pneg %p30
    %p37 = scmp.eq.s32.totalorder %s9, 1
    %p38 = por %p36, %p37
    %p39 = scmp.ne.s32.totalorder %s31, %s34
    %p40 = scmp.eq.s32.totalorder %s9, 0
    %p41 = por %p39, %p40
    %p42 = scmp.ne.s32.totalorder %s31, %s34
    %p43 = scmp.eq.s32.totalorder %s14, 1
    %p44 = por %p42, %p43
    %p45 = scmp.ne.s32.totalorder %s34, %s35
    %p46 = scmp.eq.s32.totalorder %s14, 0
    %p47 = por %p45, %p46
    %p48 = scmp.ne.s32.totalorder %s34, %s35
    %p49 = scmp.eq.s32.totalorder %s15, 1
    %p50 = por %p48, %p49
    %p52 = scmp.ne.s32.totalorder %s35, %s51
    %p53 = scmp.eq.s32.totalorder %s15, 0
    %p54 = por %p52, %p53
    %s55 = ssub.s32 %s17, %s24
    %p56 = scmp.eq.s32.totalorder %s55, 0
    %s58 = sadd.s32 %s57, 1
    %s59 = scalar_select %p56, %s57, %s58
    %p62 = pneg %p56
    %p63 = scmp.eq.s32.totalorder %s9, 1
    %p64 = por %p62, %p63
    %p65 = scmp.ne.s32.totalorder %s57, %s60
    %p66 = scmp.eq.s32.totalorder %s9, 0
    %p67 = por %p65, %p66
    %p68 = scmp.ne.s32.totalorder %s57, %s60
    %p69 = scmp.eq.s32.totalorder %s14, 1
    %p70 = por %p68, %p69
    %p71 = scmp.ne.s32.totalorder %s60, %s61
    %p72 = scmp.eq.s32.totalorder %s14, 0
    %p73 = por %p71, %p72
    %p74 = scmp.ne.s32.totalorder %s60, %s61
    %p75 = scmp.eq.s32.totalorder %s15, 1
    %p76 = por %p74, %p75
    %p78 = scmp.ne.s32.totalorder %s61, %s77
    %p79 = scmp.eq.s32.totalorder %s15, 0
    %p80 = por %p78, %p79
    %s81 = ssub.s32 %s17, %s24
    %p82 = scmp.eq.s32.totalorder %s81, 0
    %s84 = sadd.s32 %s83, 1
    %s85 = scalar_select %p82, %s83, %s84
    %p88 = pneg %p82
    %p89 = scmp.eq.s32.totalorder %s9, 1
    %p90 = por %p88, %p89
    %p91 = scmp.ne.s32.totalorder %s83, %s86
    %p92 = scmp.eq.s32.totalorder %s9, 0
    %p93 = por %p91, %p92
    %p94 = scmp.ne.s32.totalorder %s83, %s86
    %p95 = scmp.eq.s32.totalorder %s14, 1
    %p96 = por %p94, %p95
    %p97 = scmp.ne.s32.totalorder %s86, %s87
    %p98 = scmp.eq.s32.totalorder %s14, 0
    %p99 = por %p97, %p98
    %p100 = scmp.ne.s32.totalorder %s86, %s87
    %p101 = scmp.eq.s32.totalorder %s15, 1
    %p102 = por %p100, %p101
    %p104 = scmp.ne.s32.totalorder %s87, %s103
    %p105 = scmp.eq.s32.totalorder %s15, 0
    %p106 = por %p104, %p105
    %s107 = ssub.s32 %s16, %s28
    %s108 = ssub.s32 %s17, %s24
    %s109 = sor.u32 %s107, %s108
    %p110 = scmp.eq.s32.totalorder %s109, 0
    %s112 = sadd.s32 %s111, 1
    %s113 = scalar_select %p110, %s111, %s112
    %p116 = pneg %p110
    %p117 = scmp.eq.s32.totalorder %s9, 1
    %p118 = por %p116, %p117
    %p119 = scmp.ne.s32.totalorder %s111, %s114
    %p120 = scmp.eq.s32.totalorder %s9, 0
    %p121 = por %p119, %p120
    %p122 = scmp.ne.s32.totalorder %s111, %s114
    %p123 = scmp.eq.s32.totalorder %s14, 1
    %p124 = por %p122, %p123
    %p125 = scmp.ne.s32.totalorder %s114, %s115
    %p126 = scmp.eq.s32.totalorder %s14, 0
    %p127 = por %p125, %p126
    %p128 = scmp.ne.s32.totalorder %s114, %s115
    %p129 = scmp.eq.s32.totalorder %s15, 1
    %p130 = por %p128, %p129
    %p132 = scmp.ne.s32.totalorder %s115, %s131
    %p133 = scmp.eq.s32.totalorder %s15, 0
    %p134 = por %p132, %p133
    %p135 = scmp.le.s32.totalorder 1, %s9
    %p136 = scmp.lt.s32.totalorder %s9, 3
    %p137 = pnand %p135, %p136
    %p138 = pneg %p137
    // Predicated region
    $region9: #{tpu_custom_call.1} parent=5 // pred_check
      _
    $region10: #{tpu_custom_call.1} parent=5 // pred_check_branch
      %140 = sbr.rel (%p137) target = $region12
    $region11: #{tpu_custom_call.1} parent=5 // pred_region
      %s141 = ssub.s32 %s9, 1
      // Predicated region
      $region13: #{tpu_custom_call.1} parent=11 // pred_check
        %p142 = pneg %p73
      $region14: #{tpu_custom_call.1} parent=11 // pred_check_branch
        %144 = sbr.rel (%p142) target = $region16
      $region15: #{tpu_custom_call.1} parent=11 // pred_region
        %p145 = scmp.lt.s32.totalorder %s19, 0
        %s146 = scalar_select %p145, %s19, 0
        %s147 = smul.addr %s146, 4
        %s148 = scalar_lea.vmem %s1, %s147
      $region16: #{tpu_custom_call.1} parent=11 // pred_fallthru
        _
      // Predicated region
      $region17: #{tpu_custom_call.1} parent=11 // pred_check
        %p149 = pneg %p99
      $region18: #{tpu_custom_call.1} parent=11 // pred_check_branch
        %151 = sbr.rel (%p149) target = $region20
      $region19: #{tpu_custom_call.1} parent=11 // pred_region
        %p152 = scmp.lt.s32.totalorder %s19, 0
        %s153 = scalar_select %p152, %s19, 0
        %s154 = smul.addr %s153, 8
        %s155 = scalar_lea.vmem %s2, %s154
      $region20: #{tpu_custom_call.1} parent=11 // pred_fallthru
        _
    $region12: #{tpu_custom_call.1} parent=5 // pred_fallthru
      _
    %p156 = scmp.lt.s32.totalorder %s9, 2
    // Predicated region
    $region21: #{tpu_custom_call.1} parent=5 // pred_check
      %p157 = pneg %p156
    $region22: #{tpu_custom_call.1} parent=5 // pred_check_branch
      %159 = sbr.rel (%p157) target = $region24
    $region23: #{tpu_custom_call.1} parent=5 // pred_region
      // Predicated region
      $region25: #{tpu_custom_call.1} parent=23 // pred_check
        %p160 = pneg %p41
      $region26: #{tpu_custom_call.1} parent=23 // pred_check_branch
        %162 = sbr.rel (%p160) target = $region28
      $region27: #{tpu_custom_call.1} parent=23 // pred_region
        %p163 = scmp.lt.s32.totalorder %s16, 1
        %s164 = scalar_select %p163, %s16, 1
        %s165 = smul.addr %s164, 2
        %s166 = smul.addr %s165, 4
        %s167 = scalar_lea.vmem %s0, %s166
      $region28: #{tpu_custom_call.1} parent=23 // pred_fallthru
        _
    $region24: #{tpu_custom_call.1} parent=5 // pred_fallthru
      _
    %p168 = scmp.le.s32.totalorder 1, %s9
    %p169 = scmp.lt.s32.totalorder %s9, 3
    %p170 = pnand %p168, %p169
    %p171 = pneg %p170
    // Predicated region
    $region29: #{tpu_custom_call.1} parent=5 // pred_check
      _
    $region30: #{tpu_custom_call.1} parent=5 // pred_check_branch
      %173 = sbr.rel (%p170) target = $region32
    $region31: #{tpu_custom_call.1} parent=5 // pred_region
      %s174 = ssub.s32 %s9, 1
      %p175 = scmp.lt.s32.totalorder %s18, 1
      %s176 = scalar_select %p175, %s18, 1
      %s177 = smul.addr %s176, 2
      %s178 = smul.addr %s177, 4
      %s179 = scalar_lea.vmem %s0, %s178
      %p180 = pneg %p47
      %p181 = pneg %p44
      %p182 = scmp.lt.s32.totalorder %s19, 0
      %s183 = scalar_select %p182, %s19, 0
      %s184 = smul.addr %s183, 4
      %s185 = scalar_lea.vmem %s1, %s184
      %p186 = pneg %p73
      %p187 = pneg %p70
      %p188 = scmp.lt.s32.totalorder %s19, 0
      %s189 = scalar_select %p188, %s19, 0
      %s190 = smul.addr %s189, 8
      %s191 = scalar_lea.vmem %s2, %s190
      %p192 = pneg %p99
      %p193 = pneg %p96
      %p194 = pneg %p127
      %p195 = pneg %p124
      %p196 = scmp.lt.s32.totalorder %s18, 1
      %s197 = scalar_select %p196, %s18, 1
      %p198 = scmp.lt.s32.totalorder %s19, 0
      %s199 = scalar_select %p198, %s19, 0
      %s200 = smul.addr %s197, 3
      %s201 = sadd.s32 %s199, %s200
      %s202 = smul.addr %s201, 8
      %s203 = scalar_lea.vmem %s3, %s202
      %p204 = scmp.lt.s32.totalorder %s18, 1
      %s205 = scalar_select %p204, %s18, 1
      %s206 = smul.addr %s205, 2
      %s207 = smul.addr %s206, 4
      %s208 = scalar_lea.vmem %s0, %s207
      %p209 = scmp.lt.s32.totalorder %s19, 0
      %s210 = scalar_select %p209, %s19, 0
      %s211 = smul.addr %s210, 4
      %s212 = scalar_lea.vmem %s1, %s211
      %p213 = scmp.lt.s32.totalorder %s19, 0
      %s214 = scalar_select %p213, %s19, 0
      %s215 = smul.addr %s214, 8
      %s216 = scalar_lea.vmem %s2, %s215
      %p217 = scmp.lt.s32.totalorder %s18, 1
      %s218 = scalar_select %p217, %s18, 1
      %p219 = scmp.lt.s32.totalorder %s19, 0
      %s220 = scalar_select %p219, %s19, 0
      %s221 = smul.addr %s218, 3
      %s222 = sadd.s32 %s220, %s221
      %s223 = smul.addr %s222, 8
      %s224 = scalar_lea.vmem %s3, %s223
      %v226 = vld [vmem:[%s208] sm:$0xf]
      %v227 = vld [vmem:[%s208 + $0x4] sm:$0xf]
      %v228 = vld [vmem:[%s212] sm:$0xf]
      %v229 = vld [vmem:[%s212 + $0x4] sm:$0xf]
      %v230 = vld [vmem:[%s212 + $0x8] sm:$0xf]
      %v231 = vld [vmem:[%s212 + $0xc] sm:$0xf]
      %v232 = vld [vmem:[%s212 + $0x10] sm:$0xf]
      %v233 = vld [vmem:[%s212 + $0x14] sm:$0xf]
      %v234 = vld [vmem:[%s212 + $0x18] sm:$0xf]
      %v235 = vld [vmem:[%s212 + $0x1c] sm:$0xf]
      %v236 = vld [vmem:[%s216] sm:$0x1]
      %v237 = vld [vmem:[%s216 + $0x1] sm:$0xff]
      %v238 = vld [vmem:[%s216 + $0x9] sm:$0xff]
      %vm239 = vcmask 253952
      %240 = vst.msk [vmem:[%s224] sm:$0x1] %vm239, %v236
      %v243 = vunpack.c.l.b16 %v226
      %v244 = vunpack.c.l.b16 %v227
      %v245 = vpack.c.b16 %v244, %v243
      %v254 = vunpack.c.l.b16 %v228
      %v255 = vunpack.c.l.b16 %v229
      %v256 = vunpack.c.l.b16 %v230
      %v257 = vunpack.c.l.b16 %v231
      %v258 = vunpack.c.l.b16 %v232
      %v259 = vunpack.c.l.b16 %v233
      %v260 = vunpack.c.l.b16 %v234
      %v261 = vunpack.c.l.b16 %v235
      %v262 = vpack.c.b16 %v255, %v254
      %v263 = vpack.c.b16 %v257, %v256
      %v264 = vpack.c.b16 %v259, %v258
      %v265 = vpack.c.b16 %v261, %v260
      %vm270 = vcmask 523264
      %v272 = vsel %vm270, %v245, 0
      %274 = vmatprep.subr.bf16.mxu0 0
      %275 = vmatpush1.bf16.msra.mxu0 0
      %276 = vmatprep.subr.bf16.mxu0 0
      %277 = vmatpush1.bf16.msra.mxu0 0
      %278 = vmatprep.subr.bf16.mxu0 0
      %279 = vmatpush1.bf16.msra.mxu0 0
      %280 = vmatprep.subr.bf16.mxu0 0
      %281 = vmatpush1.bf16.msra.mxu0 0
      %282 = vmatprep.subr.bf16.mxu0 0
      %283 = vmatpush1.bf16.msra.mxu0 %v265
      %284 = vmatprep.subr.bf16.mxu0 0
      %285 = vmatpush1.bf16.msra.mxu0 %v264
      %286 = vmatprep.subr.bf16.mxu0 0
      %287 = vmatpush1.bf16.msra.mxu0 %v263
      %288 = vmatprep.subr.bf16.mxu0 0
      %289 = vmatpush1.bf16.msra.mxu0 %v262
      %290 = vmatprep.subr.bf16.mxu0 0
      %291 = vmatpush2.bf16.msra.mxu0 0
      %292 = vmatprep.subr.bf16.mxu0 0
      %293 = vmatpush2.bf16.msra.mxu0 0
      %294 = vmatprep.subr.bf16.mxu0 0
      %295 = vmatpush2.bf16.msra.mxu0 0
      %296 = vmatprep.subr.bf16.mxu0 0
      %297 = vmatpush2.bf16.msra.mxu0 0
      %298 = vmatprep.subr.bf16.mxu0 0
      %299 = vmatpush2.bf16.msra.mxu0 0
      %300 = vmatprep.subr.bf16.mxu0 0
      %301 = vmatpush2.bf16.msra.mxu0 0
      %302 = vmatprep.subr.bf16.mxu0 0
      %303 = vmatpush2.bf16.msra.mxu0 0
      %304 = vmatprep.subr.bf16.mxu0 0
      %305 = vmatpush2.bf16.msra.mxu0 0
      %306 = vmatprep.mubr.bf16.mxu0 0
      %307 = vmatmul.mubr.bf16.gmra.mxu0 %v272
      %v308 = vpop.f32.mrf.mxu0
      %v309 = vadd.f32 %v237, %v308
      %v310 = vpop.f32.mrf.mxu0
      %v311 = vpop.f32.mrf.mxu0
      %v312 = vadd.f32 %v238, %v311
      %v313 = vpop.f32.mrf.mxu0
      %314 = vdwg.mxu0
      %vm315 = vcmask 261120
      %316 = vst.msk [vmem:[%s224 + $0x1] sm:$0xff] %vm315, %v309
      %317 = vst.msk [vmem:[%s224 + $0x9] sm:$0xff] %vm315, %v312
      %p318 = scmp.lt.s32.totalorder %s18, 1
      %s319 = scalar_select %p318, %s18, 1
      %p320 = scmp.lt.s32.totalorder %s19, 0
      %s321 = scalar_select %p320, %s19, 0
      %s322 = smul.addr %s319, 3
      %s323 = sadd.s32 %s321, %s322
      %s324 = smul.addr %s323, 8
      %s325 = scalar_lea.vmem %s3, %s324
      // Predicated region
      $region33: #{tpu_custom_call.1} parent=31 // pred_check
        %p326 = pneg %p124
      $region34: #{tpu_custom_call.1} parent=31 // pred_check_branch
        %328 = sbr.rel (%p326) target = $region36
      $region35: #{tpu_custom_call.1} parent=31 // pred_region
        _
      $region36: #{tpu_custom_call.1} parent=31 // pred_fallthru
        _
    $region32: #{tpu_custom_call.1} parent=5 // pred_fallthru
      _
    %p329 = scmp.le.s32.totalorder 2, %s9
    // Predicated region
    $region37: #{tpu_custom_call.1} parent=5 // pred_check
      %p330 = pneg %p329
    $region38: #{tpu_custom_call.1} parent=5 // pred_check_branch
      %332 = sbr.rel (%p330) target = $region40
    $region39: #{tpu_custom_call.1} parent=5 // pred_region
      %s333 = ssub.s32 %s9, 2
      // Predicated region
      $region41: #{tpu_custom_call.1} parent=39 // pred_check
        %p334 = pneg %p130
      $region42: #{tpu_custom_call.1} parent=39 // pred_check_branch
        %336 = sbr.rel (%p334) target = $region44
      $region43: #{tpu_custom_call.1} parent=39 // pred_region
        %p337 = scmp.lt.s32.totalorder %s20, 1
        %s338 = scalar_select %p337, %s20, 1
        %p339 = scmp.lt.s32.totalorder %s21, 0
        %s340 = scalar_select %p339, %s21, 0
        %s341 = smul.addr %s338, 3
        %s342 = sadd.s32 %s340, %s341
        %s343 = smul.addr %s342, 8
        %s344 = scalar_lea.vmem %s3, %s343
      $region44: #{tpu_custom_call.1} parent=39 // pred_fallthru
        _
    $region40: #{tpu_custom_call.1} parent=5 // pred_fallthru
      _
  $region6: #{tpu_custom_call.1} parent=0 // loop_footer
    %s13 = sadd.s32 1, %s9
  $region7: #{tpu_custom_call.1} parent=0 // loop_footer_branch
    %8 = sbr.rel target = $region3
  $region8: #{tpu_custom_call.1} parent=0 // loop_exit
    _

</llo_original>
